<compile_context>
chip_gen: v7x
topology: tpu7x:2x2x1
jax: 0.10.0
libtpu: 0.0.40
codegen_flags: <defaults>
</compile_context>

<pallas_src>
import jax
import jax.numpy as jnp
from jax.experimental import pallas as pl
from jax.experimental.pallas import tpu as pltpu

_LANES = 128          # lanes per vreg
_SUB = 8              # f32 sublanes per vreg
_MAX_NT_SUB = 64      # max point-sublanes per (batch, grid step) -> 8192 pts
_MAX_BT = 8           # max batches folded into one grid step


def _round_up(x, m):
    return -(-x // m) * m


def _reproj_kernel(p_ref, pts_ref, w_ref, out_ref):
    """One grid step: BT batches x (NT_SUB * 128) points.

    p_ref:   SMEM (B_pad, 12)  row-major 3x4 projection matrices (K @ inv(pose))
    pts_ref: VMEM (BT, 5, NT_SUB, 128)  rows [X, Y, Z, u, v], point axis packed
    w_ref:   VMEM (BT, NT_SUB, 128)
    out_ref: VMEM (8, 128) lane-dense partial sum of err * w for this step
    """
    bi = pl.program_id(0)
    BT, _, NT_SUB, LANES = pts_ref.shape
    n_chunks = NT_SUB // _SUB
    eps = jnp.float32(1e-4)

    acc = jnp.zeros((_SUB, LANES), jnp.float32)
    for i in range(BT):                              # static unroll over batches
        b = bi * BT + i                              # global (padded) batch idx
        P = [p_ref[b, j] for j in range(12)]         # 12 SMEM scalar loads
        for c in range(n_chunks):                    # static unroll, (8,128) chunks
            sl = slice(c * _SUB, (c + 1) * _SUB)
            X = pts_ref[i, 0, sl, :]
            Y = pts_ref[i, 1, sl, :]
            Z = pts_ref[i, 2, sl, :]
            u = pts_ref[i, 3, sl, :]
            v = pts_ref[i, 4, sl, :]
            px = P[0] * X + P[1] * Y + P[2] * Z + P[3]
            py = P[4] * X + P[5] * Y + P[6] * Z + P[7]
            pz = P[8] * X + P[9] * Y + P[10] * Z + P[11]
            # NB: matches reference semantics (sign-flipping clamp for tiny |z|).
            scale = jnp.where(jnp.abs(pz) > eps, pz, eps)
            inv = pl.reciprocal(scale, approx=True)  # 1 EUP op instead of 2 divs
            du = px * inv - u
            dv = py * inv - v
            err = jnp.sqrt(du * du + dv * dv)        # ||proj - p2d||_2
            acc = acc + err * w_ref[i, sl, :]

    out_ref[...] = acc


def reprojection_loss(intrinsic, pose, p3d2d, weights):
    """intrinsic: (3,4); pose: (B,4,4); p3d2d: (B,N,5); weights: (B,N)."""
    B, N, F = p3d2d.shape
    assert F == 5
    f32 = jnp.float32

    intrinsic = intrinsic.astype(f32)
    pose = pose.astype(f32)
    p3d2d = p3d2d.astype(f32)
    weights = weights.astype(f32)

    # ---- P = K @ inv(pose): tiny (B,3,4) product, hoisted out of the kernel.
    Rt = jnp.swapaxes(pose[:, :3, :3], -1, -2)                  # R^T
    it = -jnp.einsum("bij,bj->bi", Rt, pose[:, :3, 3])          # -R^T t
    K33, k3 = intrinsic[:, :3], intrinsic[:, 3]
    P = jnp.concatenate(
        [jnp.einsum("ij,bjk->bik", K33, Rt),
         (jnp.einsum("ij,bj->bi", K33, it) + k3)[:, :, None]], axis=-1)  # (B,3,4)

    # ---- tiling ------------------------------------------------------------
    BT = B if B <= _MAX_BT else _MAX_BT
    B_pad = _round_up(B, BT)
    ns = _round_up(_round_up(N, _LANES) // _LANES, _SUB)        # point sublanes
    NT_SUB = min(ns, _MAX_NT_SUB)
    ns_pad = _round_up(ns, NT_SUB)
    N_pad = ns_pad * _LANES
    GB, GN = B_pad // BT, ns_pad // NT_SUB

    # ---- repack to SoA + pad (padded points / batches carry weight 0) -------
    # TODO(synk): if the upstream producer emitted p3d2d already in SoA
    # (B, 5, N) layout, this HBM transpose pass could be skipped entirely.
    pts = jnp.transpose(p3d2d, (0, 2, 1))                       # (B, 5, N)
    pts = jnp.pad(pts, ((0, B_pad - B), (0, 0), (0, N_pad - N)))
    w = jnp.pad(weights, ((0, B_pad - B), (0, N_pad - N)))
    P = jnp.pad(P, ((0, B_pad - B), (0, 0), (0, 0)))

    pts = pts.reshape(B_pad, 5, ns_pad, _LANES)
    w = w.reshape(B_pad, ns_pad, _LANES)
    p_flat = P.reshape(B_pad, 12)

    partials = pl.pallas_call(
        _reproj_kernel,
        out_shape=jax.ShapeDtypeStruct((GB * _SUB, GN * _LANES), f32),
        grid=(GB, GN),
        in_specs=[
            pl.BlockSpec(memory_space=pltpu.SMEM),                          # P table (B_pad, 12)
            pl.BlockSpec((BT, 5, NT_SUB, _LANES), lambda bi, ni: (bi, 0, ni, 0)),
            pl.BlockSpec((BT, NT_SUB, _LANES), lambda bi, ni: (bi, ni, 0)),
        ],
        out_specs=pl.BlockSpec((_SUB, _LANES), lambda bi, ni: (bi, ni)),
        compiler_params=pltpu.CompilerParams(
            dimension_semantics=("parallel", "parallel")),
    )(p_flat, pts, w)

    return jnp.sum(partials) / f32(B * N)


def reference_loss(K, pose, p3d2d, weights):
    """Pure-JAX reference matching the PyTorch module."""
    B = pose.shape[0]
    Rt = jnp.swapaxes(pose[:, :3, :3], -1, -2)
    it = -jnp.einsum("bij,bj->bi", Rt, pose[:, :3, 3])
    bottom = jnp.tile(jnp.array([[[0.0, 0.0, 0.0, 1.0]]], jnp.float32), (B, 1, 1))
    inv = jnp.concatenate([jnp.concatenate([Rt, it[:, :, None]], axis=-1), bottom], axis=1)
    P = jnp.einsum("ij,bjk->bik", K, inv)                           # (B, 3, 4)
    p3d_h = jnp.concatenate([p3d2d[:, :, :3], jnp.ones_like(p3d2d[:, :, :1])], axis=-1)
    proj = jnp.einsum("bij,bnj->bni", P, p3d_h)                     # (B, N, 3)
    z = proj[:, :, 2:3]
    scale = jnp.where(jnp.abs(z) > 1e-4, z, jnp.float32(1e-4))
    p2 = proj[:, :, :2] / scale
    err = jnp.linalg.norm(p2 - p3d2d[:, :, 3:], axis=-1)
    return jnp.mean(err * weights)


if __name__ == "__main__":
    import numpy as np

    def make_poses(key, B):
        ka, kt = jax.random.split(key)
        angles = np.asarray(jax.random.uniform(ka, (B, 3), minval=-0.4, maxval=0.4))
        trans = np.asarray(jax.random.uniform(kt, (B, 3), minval=-0.6, maxval=0.6))
        poses = []
        for a, tv in zip(angles, trans):
            cx, sx = np.cos(a[0]), np.sin(a[0])
            cy, sy = np.cos(a[1]), np.sin(a[1])
            cz, sz = np.cos(a[2]), np.sin(a[2])
            Rx = np.array([[1, 0, 0], [0, cx, -sx], [0, sx, cx]])
            Ry = np.array([[cy, 0, sy], [0, 1, 0], [-sy, 0, cy]])
            Rz = np.array([[cz, -sz, 0], [sz, cz, 0], [0, 0, 1]])
            T = np.eye(4, dtype=np.float64)
            T[:3, :3] = Rz @ Ry @ Rx
            T[:3, 3] = tv
            poses.append(T)
        return jnp.asarray(np.stack(poses), dtype=jnp.float32)

    # deterministic intrinsic matrix (3x4), set in-script
    K = jnp.array([[200.0, 0.0, 64.0, 0.0],
                   [0.0, 200.0, 64.0, 0.0],
                   [0.0, 0.0, 1.0, 0.0]], dtype=jnp.float32)

    # two configs: small single-tile case, plus batch-padded / multi-block case
    for cfg_i, (B, N) in enumerate([(2, 128), (10, 300)]):
        key = jax.random.PRNGKey(0)
        kp, kw, kt, kpose = jax.random.split(key, 4)
        pose = make_poses(kpose, B)                                  # (B, 4, 4)

        p3d = jax.random.uniform(kp, (B, N, 3), minval=-3.0, maxval=3.0) \
            + jnp.array([0.0, 0.0, 6.0], jnp.float32)
        p2d = jax.random.uniform(kt, (B, N, 2), minval=0.0, maxval=128.0)
        p3d2d = jnp.concatenate([p3d, p2d], axis=-1).astype(jnp.float32)  # (B, N, 5)
        weights = jax.random.uniform(kw, (B, N), minval=0.0, maxval=1.0).astype(jnp.float32)

        loss = jax.block_until_ready(reprojection_loss(K, pose, p3d2d, weights))
        ref = reference_loss(K, pose, p3d2d, weights)
        # 2e-3 tolerance leaves margin for the approx EUP reciprocal (~2^-12).
        assert jnp.allclose(loss, ref, rtol=2e-3, atol=2e-3), (cfg_i, loss, ref)

    print("KERNEL_OK")
</pallas_src>

<mosaic_0001>
module attributes {stable_mosaic.version = 11 : i64} {
  func.func @_reproj_kernel(%arg0: i32, %arg1: i32, %arg2: memref<2x12xf32, #tpu.memory_space<smem>>, %arg3: memref<2x5x8x128xf32, #tpu.memory_space<vmem>>, %arg4: memref<2x8x128xf32, #tpu.memory_space<vmem>>, %arg5: memref<8x128xf32, #tpu.memory_space<vmem>>) attributes {dimension_semantics = [#tpu.dimension_semantics<parallel>, #tpu.dimension_semantics<parallel>], iteration_bounds = array<i64: 1, 1>, scalar_prefetch = 0 : i64, scratch_operands = 0 : i64, tpu.core_type = #tpu.core_type<tc>, window_params = [{transform_indices = @transform_0, window_bounds = array<i64: 2, 12>}, {transform_indices = @transform_1, window_bounds = array<i64: 2, 5, 8, 128>}, {transform_indices = @transform_2, window_bounds = array<i64: 2, 8, 128>}, {transform_indices = @transform_3, window_bounds = array<i64: 8, 128>}]} {
    %cst = arith.constant 0.000000e+00 : f32
    %0 = vector.broadcast %cst : f32 to vector<8x128xf32>
    %c2_i32 = arith.constant 2 : i32
    %1 = arith.muli %arg0, %c2_i32 : i32
    %c0_i32 = arith.constant 0 : i32
    %2 = arith.addi %1, %c0_i32 : i32
    %3 = arith.index_cast %2 : i32 to index
    %c0 = arith.constant 0 : index
    %4 = memref.load %arg2[%3, %c0] : memref<2x12xf32, #tpu.memory_space<smem>>
    %5 = arith.index_cast %2 : i32 to index
    %c1 = arith.constant 1 : index
    %6 = memref.load %arg2[%5, %c1] : memref<2x12xf32, #tpu.memory_space<smem>>
    %7 = arith.index_cast %2 : i32 to index
    %c2 = arith.constant 2 : index
    %8 = memref.load %arg2[%7, %c2] : memref<2x12xf32, #tpu.memory_space<smem>>
    %9 = arith.index_cast %2 : i32 to index
    %c3 = arith.constant 3 : index
    %10 = memref.load %arg2[%9, %c3] : memref<2x12xf32, #tpu.memory_space<smem>>
    %11 = arith.index_cast %2 : i32 to index
    %c4 = arith.constant 4 : index
    %12 = memref.load %arg2[%11, %c4] : memref<2x12xf32, #tpu.memory_space<smem>>
    %13 = arith.index_cast %2 : i32 to index
    %c5 = arith.constant 5 : index
    %14 = memref.load %arg2[%13, %c5] : memref<2x12xf32, #tpu.memory_space<smem>>
    %15 = arith.index_cast %2 : i32 to index
    %c6 = arith.constant 6 : index
    %16 = memref.load %arg2[%15, %c6] : memref<2x12xf32, #tpu.memory_space<smem>>
    %17 = arith.index_cast %2 : i32 to index
    %c7 = arith.constant 7 : index
    %18 = memref.load %arg2[%17, %c7] : memref<2x12xf32, #tpu.memory_space<smem>>
    %19 = arith.index_cast %2 : i32 to index
    %c8 = arith.constant 8 : index
    %20 = memref.load %arg2[%19, %c8] : memref<2x12xf32, #tpu.memory_space<smem>>
    %21 = arith.index_cast %2 : i32 to index
    %c9 = arith.constant 9 : index
    %22 = memref.load %arg2[%21, %c9] : memref<2x12xf32, #tpu.memory_space<smem>>
    %23 = arith.index_cast %2 : i32 to index
    %c10 = arith.constant 10 : index
    %24 = memref.load %arg2[%23, %c10] : memref<2x12xf32, #tpu.memory_space<smem>>
    %25 = arith.index_cast %2 : i32 to index
    %c11 = arith.constant 11 : index
    %26 = memref.load %arg2[%25, %c11] : memref<2x12xf32, #tpu.memory_space<smem>>
    %c0_0 = arith.constant 0 : index
    %c0_1 = arith.constant 0 : index
    %c0_2 = arith.constant 0 : index
    %c0_3 = arith.constant 0 : index
    %27 = vector.load %arg3[%c0_0, %c0_1, %c0_2, %c0_3] : memref<2x5x8x128xf32, #tpu.memory_space<vmem>>, vector<1x1x8x128xf32>
    %28 = vector.shape_cast %27 : vector<1x1x8x128xf32> to vector<8x128xf32>
    %c0_4 = arith.constant 0 : index
    %c1_5 = arith.constant 1 : index
    %c0_6 = arith.constant 0 : index
    %c0_7 = arith.constant 0 : index
    %29 = vector.load %arg3[%c0_4, %c1_5, %c0_6, %c0_7] : memref<2x5x8x128xf32, #tpu.memory_space<vmem>>, vector<1x1x8x128xf32>
    %30 = vector.shape_cast %29 : vector<1x1x8x128xf32> to vector<8x128xf32>
    %c0_8 = arith.constant 0 : index
    %c2_9 = arith.constant 2 : index
    %c0_10 = arith.constant 0 : index
    %c0_11 = arith.constant 0 : index
    %31 = vector.load %arg3[%c0_8, %c2_9, %c0_10, %c0_11] : memref<2x5x8x128xf32, #tpu.memory_space<vmem>>, vector<1x1x8x128xf32>
    %32 = vector.shape_cast %31 : vector<1x1x8x128xf32> to vector<8x128xf32>
    %c0_12 = arith.constant 0 : index
    %c3_13 = arith.constant 3 : index
    %c0_14 = arith.constant 0 : index
    %c0_15 = arith.constant 0 : index
    %33 = vector.load %arg3[%c0_12, %c3_13, %c0_14, %c0_15] : memref<2x5x8x128xf32, #tpu.memory_space<vmem>>, vector<1x1x8x128xf32>
    %34 = vector.shape_cast %33 : vector<1x1x8x128xf32> to vector<8x128xf32>
    %c0_16 = arith.constant 0 : index
    %c4_17 = arith.constant 4 : index
    %c0_18 = arith.constant 0 : index
    %c0_19 = arith.constant 0 : index
    %35 = vector.load %arg3[%c0_16, %c4_17, %c0_18, %c0_19] : memref<2x5x8x128xf32, #tpu.memory_space<vmem>>, vector<1x1x8x128xf32>
    %36 = vector.shape_cast %35 : vector<1x1x8x128xf32> to vector<8x128xf32>
    %37 = vector.broadcast %4 : f32 to vector<8x128xf32>
    %38 = arith.mulf %37, %28 : vector<8x128xf32>
    %39 = vector.broadcast %6 : f32 to vector<8x128xf32>
    %40 = arith.mulf %39, %30 : vector<8x128xf32>
    %41 = arith.addf %38, %40 : vector<8x128xf32>
    %42 = vector.broadcast %8 : f32 to vector<8x128xf32>
    %43 = arith.mulf %42, %32 : vector<8x128xf32>
    %44 = arith.addf %41, %43 : vector<8x128xf32>
    %45 = vector.broadcast %10 : f32 to vector<8x128xf32>
    %46 = arith.addf %44, %45 : vector<8x128xf32>
    %47 = vector.broadcast %12 : f32 to vector<8x128xf32>
    %48 = arith.mulf %47, %28 : vector<8x128xf32>
    %49 = vector.broadcast %14 : f32 to vector<8x128xf32>
    %50 = arith.mulf %49, %30 : vector<8x128xf32>
    %51 = arith.addf %48, %50 : vector<8x128xf32>
    %52 = vector.broadcast %16 : f32 to vector<8x128xf32>
    %53 = arith.mulf %52, %32 : vector<8x128xf32>
    %54 = arith.addf %51, %53 : vector<8x128xf32>
    %55 = vector.broadcast %18 : f32 to vector<8x128xf32>
    %56 = arith.addf %54, %55 : vector<8x128xf32>
    %57 = vector.broadcast %20 : f32 to vector<8x128xf32>
    %58 = arith.mulf %57, %28 : vector<8x128xf32>
    %59 = vector.broadcast %22 : f32 to vector<8x128xf32>
    %60 = arith.mulf %59, %30 : vector<8x128xf32>
    %61 = arith.addf %58, %60 : vector<8x128xf32>
    %62 = vector.broadcast %24 : f32 to vector<8x128xf32>
    %63 = arith.mulf %62, %32 : vector<8x128xf32>
    %64 = arith.addf %61, %63 : vector<8x128xf32>
    %65 = vector.broadcast %26 : f32 to vector<8x128xf32>
    %66 = arith.addf %64, %65 : vector<8x128xf32>
    %67 = math.absf %66 : vector<8x128xf32>
    %cst_20 = arith.constant 9.99999974E-5 : f32
    %68 = vector.broadcast %cst_20 : f32 to vector<8x128xf32>
    %69 = arith.cmpf ogt, %67, %68 : vector<8x128xf32>
    %cst_21 = arith.constant 9.99999974E-5 : f32
    %70 = vector.broadcast %cst_21 : f32 to vector<8x128xf32>
    %71 = arith.select %69, %66, %70 : vector<8x128xi1>, vector<8x128xf32>
    %72 = tpu.reciprocal %71 {approx = true} : vector<8x128xf32> -> vector<8x128xf32>
    %73 = arith.mulf %46, %72 : vector<8x128xf32>
    %74 = arith.subf %73, %34 : vector<8x128xf32>
    %75 = arith.mulf %56, %72 : vector<8x128xf32>
    %76 = arith.subf %75, %36 : vector<8x128xf32>
    %77 = arith.mulf %74, %74 : vector<8x128xf32>
    %78 = arith.mulf %76, %76 : vector<8x128xf32>
    %79 = arith.addf %77, %78 : vector<8x128xf32>
    %80 = math.sqrt %79 : vector<8x128xf32>
    %c0_22 = arith.constant 0 : index
    %c0_23 = arith.constant 0 : index
    %c0_24 = arith.constant 0 : index
    %81 = vector.load %arg4[%c0_22, %c0_23, %c0_24] : memref<2x8x128xf32, #tpu.memory_space<vmem>>, vector<1x8x128xf32>
    %82 = vector.shape_cast %81 : vector<1x8x128xf32> to vector<8x128xf32>
    %83 = arith.mulf %80, %82 : vector<8x128xf32>
    %84 = arith.addf %0, %83 : vector<8x128xf32>
    %c2_i32_25 = arith.constant 2 : i32
    %85 = arith.muli %arg0, %c2_i32_25 : i32
    %c1_i32 = arith.constant 1 : i32
    %86 = arith.addi %85, %c1_i32 : i32
    %87 = arith.index_cast %86 : i32 to index
    %c0_26 = arith.constant 0 : index
    %88 = memref.load %arg2[%87, %c0_26] : memref<2x12xf32, #tpu.memory_space<smem>>
    %89 = arith.index_cast %86 : i32 to index
    %c1_27 = arith.constant 1 : index
    %90 = memref.load %arg2[%89, %c1_27] : memref<2x12xf32, #tpu.memory_space<smem>>
    %91 = arith.index_cast %86 : i32 to index
    %c2_28 = arith.constant 2 : index
    %92 = memref.load %arg2[%91, %c2_28] : memref<2x12xf32, #tpu.memory_space<smem>>
    %93 = arith.index_cast %86 : i32 to index
    %c3_29 = arith.constant 3 : index
    %94 = memref.load %arg2[%93, %c3_29] : memref<2x12xf32, #tpu.memory_space<smem>>
    %95 = arith.index_cast %86 : i32 to index
    %c4_30 = arith.constant 4 : index
    %96 = memref.load %arg2[%95, %c4_30] : memref<2x12xf32, #tpu.memory_space<smem>>
    %97 = arith.index_cast %86 : i32 to index
    %c5_31 = arith.constant 5 : index
    %98 = memref.load %arg2[%97, %c5_31] : memref<2x12xf32, #tpu.memory_space<smem>>
    %99 = arith.index_cast %86 : i32 to index
    %c6_32 = arith.constant 6 : index
    %100 = memref.load %arg2[%99, %c6_32] : memref<2x12xf32, #tpu.memory_space<smem>>
    %101 = arith.index_cast %86 : i32 to index
    %c7_33 = arith.constant 7 : index
    %102 = memref.load %arg2[%101, %c7_33] : memref<2x12xf32, #tpu.memory_space<smem>>
    %103 = arith.index_cast %86 : i32 to index
    %c8_34 = arith.constant 8 : index
    %104 = memref.load %arg2[%103, %c8_34] : memref<2x12xf32, #tpu.memory_space<smem>>
    %105 = arith.index_cast %86 : i32 to index
    %c9_35 = arith.constant 9 : index
    %106 = memref.load %arg2[%105, %c9_35] : memref<2x12xf32, #tpu.memory_space<smem>>
    %107 = arith.index_cast %86 : i32 to index
    %c10_36 = arith.constant 10 : index
    %108 = memref.load %arg2[%107, %c10_36] : memref<2x12xf32, #tpu.memory_space<smem>>
    %109 = arith.index_cast %86 : i32 to index
    %c11_37 = arith.constant 11 : index
    %110 = memref.load %arg2[%109, %c11_37] : memref<2x12xf32, #tpu.memory_space<smem>>
    %c1_38 = arith.constant 1 : index
    %c0_39 = arith.constant 0 : index
    %c0_40 = arith.constant 0 : index
    %c0_41 = arith.constant 0 : index
    %111 = vector.load %arg3[%c1_38, %c0_39, %c0_40, %c0_41] : memref<2x5x8x128xf32, #tpu.memory_space<vmem>>, vector<1x1x8x128xf32>
    %112 = vector.shape_cast %111 : vector<1x1x8x128xf32> to vector<8x128xf32>
    %c1_42 = arith.constant 1 : index
    %c1_43 = arith.constant 1 : index
    %c0_44 = arith.constant 0 : index
    %c0_45 = arith.constant 0 : index
    %113 = vector.load %arg3[%c1_42, %c1_43, %c0_44, %c0_45] : memref<2x5x8x128xf32, #tpu.memory_space<vmem>>, vector<1x1x8x128xf32>
    %114 = vector.shape_cast %113 : vector<1x1x8x128xf32> to vector<8x128xf32>
    %c1_46 = arith.constant 1 : index
    %c2_47 = arith.constant 2 : index
    %c0_48 = arith.constant 0 : index
    %c0_49 = arith.constant 0 : index
    %115 = vector.load %arg3[%c1_46, %c2_47, %c0_48, %c0_49] : memref<2x5x8x128xf32, #tpu.memory_space<vmem>>, vector<1x1x8x128xf32>
    %116 = vector.shape_cast %115 : vector<1x1x8x128xf32> to vector<8x128xf32>
    %c1_50 = arith.constant 1 : index
    %c3_51 = arith.constant 3 : index
    %c0_52 = arith.constant 0 : index
    %c0_53 = arith.constant 0 : index
    %117 = vector.load %arg3[%c1_50, %c3_51, %c0_52, %c0_53] : memref<2x5x8x128xf32, #tpu.memory_space<vmem>>, vector<1x1x8x128xf32>
    %118 = vector.shape_cast %117 : vector<1x1x8x128xf32> to vector<8x128xf32>
    %c1_54 = arith.constant 1 : index
    %c4_55 = arith.constant 4 : index
    %c0_56 = arith.constant 0 : index
    %c0_57 = arith.constant 0 : index
    %119 = vector.load %arg3[%c1_54, %c4_55, %c0_56, %c0_57] : memref<2x5x8x128xf32, #tpu.memory_space<vmem>>, vector<1x1x8x128xf32>
    %120 = vector.shape_cast %119 : vector<1x1x8x128xf32> to vector<8x128xf32>
    %121 = vector.broadcast %88 : f32 to vector<8x128xf32>
    %122 = arith.mulf %121, %112 : vector<8x128xf32>
    %123 = vector.broadcast %90 : f32 to vector<8x128xf32>
    %124 = arith.mulf %123, %114 : vector<8x128xf32>
    %125 = arith.addf %122, %124 : vector<8x128xf32>
    %126 = vector.broadcast %92 : f32 to vector<8x128xf32>
    %127 = arith.mulf %126, %116 : vector<8x128xf32>
    %128 = arith.addf %125, %127 : vector<8x128xf32>
    %129 = vector.broadcast %94 : f32 to vector<8x128xf32>
    %130 = arith.addf %128, %129 : vector<8x128xf32>
    %131 = vector.broadcast %96 : f32 to vector<8x128xf32>
    %132 = arith.mulf %131, %112 : vector<8x128xf32>
    %133 = vector.broadcast %98 : f32 to vector<8x128xf32>
    %134 = arith.mulf %133, %114 : vector<8x128xf32>
    %135 = arith.addf %132, %134 : vector<8x128xf32>
    %136 = vector.broadcast %100 : f32 to vector<8x128xf32>
    %137 = arith.mulf %136, %116 : vector<8x128xf32>
    %138 = arith.addf %135, %137 : vector<8x128xf32>
    %139 = vector.broadcast %102 : f32 to vector<8x128xf32>
    %140 = arith.addf %138, %139 : vector<8x128xf32>
    %141 = vector.broadcast %104 : f32 to vector<8x128xf32>
    %142 = arith.mulf %141, %112 : vector<8x128xf32>
    %143 = vector.broadcast %106 : f32 to vector<8x128xf32>
    %144 = arith.mulf %143, %114 : vector<8x128xf32>
    %145 = arith.addf %142, %144 : vector<8x128xf32>
    %146 = vector.broadcast %108 : f32 to vector<8x128xf32>
    %147 = arith.mulf %146, %116 : vector<8x128xf32>
    %148 = arith.addf %145, %147 : vector<8x128xf32>
    %149 = vector.broadcast %110 : f32 to vector<8x128xf32>
    %150 = arith.addf %148, %149 : vector<8x128xf32>
    %151 = math.absf %150 : vector<8x128xf32>
    %cst_58 = arith.constant 9.99999974E-5 : f32
    %152 = vector.broadcast %cst_58 : f32 to vector<8x128xf32>
    %153 = arith.cmpf ogt, %151, %152 : vector<8x128xf32>
    %cst_59 = arith.constant 9.99999974E-5 : f32
    %154 = vector.broadcast %cst_59 : f32 to vector<8x128xf32>
    %155 = arith.select %153, %150, %154 : vector<8x128xi1>, vector<8x128xf32>
    %156 = tpu.reciprocal %155 {approx = true} : vector<8x128xf32> -> vector<8x128xf32>
    %157 = arith.mulf %130, %156 : vector<8x128xf32>
    %158 = arith.subf %157, %118 : vector<8x128xf32>
    %159 = arith.mulf %140, %156 : vector<8x128xf32>
    %160 = arith.subf %159, %120 : vector<8x128xf32>
    %161 = arith.mulf %158, %158 : vector<8x128xf32>
    %162 = arith.mulf %160, %160 : vector<8x128xf32>
    %163 = arith.addf %161, %162 : vector<8x128xf32>
    %164 = math.sqrt %163 : vector<8x128xf32>
    %c1_60 = arith.constant 1 : index
    %c0_61 = arith.constant 0 : index
    %c0_62 = arith.constant 0 : index
    %165 = vector.load %arg4[%c1_60, %c0_61, %c0_62] : memref<2x8x128xf32, #tpu.memory_space<vmem>>, vector<1x8x128xf32>
    %166 = vector.shape_cast %165 : vector<1x8x128xf32> to vector<8x128xf32>
    %167 = arith.mulf %164, %166 : vector<8x128xf32>
    %168 = arith.addf %84, %167 : vector<8x128xf32>
    %c0_63 = arith.constant 0 : index
    %c0_64 = arith.constant 0 : index
    %169 = vector.load %arg5[%c0_63, %c0_64] : memref<8x128xf32, #tpu.memory_space<vmem>>, vector<8x128xf32>
    tpu.vector_store %arg5[%c0_63, %c0_64], %168 {strides = array<i32>} : memref<8x128xf32, #tpu.memory_space<vmem>>, vector<8x128xf32>,
    return
  }
  func.func @transform_0(%arg0: i32, %arg1: i32) -> (i32, i32) {
    %c0_i32 = arith.constant 0 : i32
    %c0_i32_0 = arith.constant 0 : i32
    %c0_i32_1 = arith.constant 0 : i32
    return %c0_i32, %c0_i32_0 : i32, i32
  }
  func.func @transform_1(%arg0: i32, %arg1: i32) -> (i32, i32, i32, i32) {
    %c0_i32 = arith.constant 0 : i32
    %c0_i32_0 = arith.constant 0 : i32
    %c0_i32_1 = arith.constant 0 : i32
    return %arg0, %c0_i32, %arg1, %c0_i32_0 : i32, i32, i32, i32
  }
  func.func @transform_2(%arg0: i32, %arg1: i32) -> (i32, i32, i32) {
    %c0_i32 = arith.constant 0 : i32
    %c0_i32_0 = arith.constant 0 : i32
    return %arg0, %arg1, %c0_i32 : i32, i32, i32
  }
  func.func @transform_3(%arg0: i32, %arg1: i32) -> (i32, i32) {
    %c0_i32 = arith.constant 0 : i32
    return %arg0, %arg1 : i32, i32
  }
}

</mosaic_0001>

<llo_original>
// kernel: tpu_custom_call.1
$region0: #{tpu_custom_call.1}
  #allocation0 [shape = 'u32[]', space=smem, size = 0x4, offset = 0x4, fixed_abs, tag = 'smem constant byte address 0x4 - core index']
  #allocation1 [shape = 'u32[144,128]{1,0:T(1,128)}', space=vmem, size = 0x12000, scoped, tag = 'internal scratch']
  %s0 = inlined_call_operand.hbm [shape: f32[2,12], index: 0, kind: input, shape index: {}]
  %s1 = inlined_call_operand.hbm [shape: f32[2,5,8,128], index: 1, kind: input, shape index: {}]
  %s2 = inlined_call_operand.hbm [shape: f32[2,8,128], index: 2, kind: input, shape index: {}]
  %s3 = inlined_call_operand.hbm [shape: f32[8,128], index: 3, kind: output, shape index: {}]
  %s4 = sld [smem:[#allocation0]]
  $region34: #{tpu_custom_call.1} parent=0
    _
  %s6 = ssub.s32 1, %s4
  %s7 = scalar_select 0, %s6, %s4
  $region1: #{tpu_custom_call.1} parent=0
    #allocation2 [shape = 'u8[1024]{0}', space=smem, size = 0x400, scoped, tag = 'input window, operand 0, single buffered']
    #allocation3 [shape = 's32[1]{0}', space=sflag, size = 0x4, scoped, tag = 'scoped memory for tpu_custom_call.1']
    #allocation4 [shape = 's32[1]{0}', space=sflag, size = 0x4, scoped, tag = 'scoped memory for tpu_custom_call.1']
    #allocation5 [shape = 's32[1]{0}', space=sflag, size = 0x4, scoped, tag = 'scoped memory for tpu_custom_call.1']
    #allocation6 [shape = 'u8[40960]{0}', space=vmem, size = 0xa000, scoped, tag = 'input window, operand 1, single buffered']
    #allocation7 [shape = 'u8[8192]{0}', space=vmem, size = 0x2000, scoped, tag = 'input window, operand 2, single buffered']
    #allocation8 [shape = 's32[1]{0}', space=sflag, size = 0x4, scoped, tag = 'scoped memory for tpu_custom_call.1']
    #allocation9 [shape = 'u8[4096]{0}', space=vmem, size = 0x1000, scoped, tag = 'output window, operand 0, single buffered']
    %8 = vsyncpa [#allocation5], 0
    %9 = vsyncpa [#allocation3], 0
    %10 = vsyncpa [#allocation8], 0
    %11 = vsyncpa [#allocation4], 0
    // Predicated region
    $region2: #{tpu_custom_call.1} parent=1 // pred_check
      _
    $region3: #{tpu_custom_call.1} parent=1 // pred_check_branch
      %13 = sbr.rel (0) target = $region5
    $region4: #{tpu_custom_call.1} parent=1 // pred_region
      %s15 = ssub.s32 32, 32
      %16 = vsyncadd [#allocation5], %s15
      %19 = dma.hbm_to_smem %s0, 32, [#allocation2], [#allocation5]
    $region5: #{tpu_custom_call.1} parent=1 // pred_fallthru
      _
    // Predicated region
    $region6: #{tpu_custom_call.1} parent=1 // pred_check
      _
    $region7: #{tpu_custom_call.1} parent=1 // pred_check_branch
      %21 = sbr.rel (0) target = $region9
    $region8: #{tpu_custom_call.1} parent=1 // pred_region
      %s23 = ssub.s32 1280, 1280
      %24 = vsyncadd [#allocation3], %s23
      %s25 = sshll.u32 [#allocation6], 4
      %s26 = int_to_ptr.vmem [resolvable:$true] %s25
      %31 = dma.hbm_to_vmem [thread:$0]  %s1, 1280, %s26, [#allocation3], 128, 128, 8
    $region9: #{tpu_custom_call.1} parent=1 // pred_fallthru
      _
    // Predicated region
    $region10: #{tpu_custom_call.1} parent=1 // pred_check
      _
    $region11: #{tpu_custom_call.1} parent=1 // pred_check_branch
      %33 = sbr.rel (0) target = $region13
    $region12: #{tpu_custom_call.1} parent=1 // pred_region
      %s35 = ssub.s32 256, 256
      %36 = vsyncadd [#allocation8], %s35
      %s37 = sshll.u32 [#allocation7], 4
      %s38 = int_to_ptr.vmem [resolvable:$true] %s37
      %43 = dma.hbm_to_vmem [thread:$0]  %s2, 256, %s38, [#allocation8], 128, 128, 8
    $region13: #{tpu_custom_call.1} parent=1 // pred_fallthru
      _
    // Predicated region
    $region14: #{tpu_custom_call.1} parent=1 // pred_check
      _
    $region15: #{tpu_custom_call.1} parent=1 // pred_check_branch
      %45 = sbr.rel (0) target = $region17
    $region16: #{tpu_custom_call.1} parent=1 // pred_region
      %46 = dma.done [#allocation5], 32
    $region17: #{tpu_custom_call.1} parent=1 // pred_fallthru
      _
    // Predicated region
    $region18: #{tpu_custom_call.1} parent=1 // pred_check
      _
    $region19: #{tpu_custom_call.1} parent=1 // pred_check_branch
      %48 = sbr.rel (0) target = $region21
    $region20: #{tpu_custom_call.1} parent=1 // pred_region
      %49 = dma.done [#allocation3], 1280
    $region21: #{tpu_custom_call.1} parent=1 // pred_fallthru
      _
    // Predicated region
    $region22: #{tpu_custom_call.1} parent=1 // pred_check
      _
    $region23: #{tpu_custom_call.1} parent=1 // pred_check_branch
      %51 = sbr.rel (0) target = $region25
    $region24: #{tpu_custom_call.1} parent=1 // pred_region
      %52 = dma.done [#allocation8], 256
    $region25: #{tpu_custom_call.1} parent=1 // pred_fallthru
      _
    %53 = sfence
    %s54 = smul.u32 0, 2
    %s55 = smul.u32 %s54, 128
    %s56 = sld [smem:[#allocation2 + %s55]]
    %s57 = sadd.s32 %s55, 1
    %s58 = sld [smem:[#allocation2 + %s57]]
    %s59 = sadd.s32 %s55, 2
    %s60 = sld [smem:[#allocation2 + %s59]]
    %s61 = sadd.s32 %s55, 3
    %s62 = sld [smem:[#allocation2 + %s61]]
    %s63 = sadd.s32 %s55, 4
    %s64 = sld [smem:[#allocation2 + %s63]]
    %s65 = sadd.s32 %s55, 5
    %s66 = sld [smem:[#allocation2 + %s65]]
    %s67 = sadd.s32 %s55, 6
    %s68 = sld [smem:[#allocation2 + %s67]]
    %s69 = sadd.s32 %s55, 7
    %s70 = sld [smem:[#allocation2 + %s69]]
    %s71 = sadd.s32 %s55, 8
    %s72 = sld [smem:[#allocation2 + %s71]]
    %s73 = sadd.s32 %s55, 9
    %s74 = sld [smem:[#allocation2 + %s73]]
    %s75 = sadd.s32 %s55, 10
    %s76 = sld [smem:[#allocation2 + %s75]]
    %s77 = sadd.s32 %s55, 11
    %s78 = sld [smem:[#allocation2 + %s77]]
    %v79 = vld [vmem:[#allocation6] sm:$0xff]
    %s80 = scalar_lea.vmem [#allocation6], 8
    %v81 = vld [vmem:[%s80] sm:$0xff]
    %s82 = scalar_lea.vmem [#allocation6], 16
    %v83 = vld [vmem:[%s82] sm:$0xff]
    %s84 = scalar_lea.vmem [#allocation6], 24
    %v85 = vld [vmem:[%s84] sm:$0xff]
    %s86 = scalar_lea.vmem [#allocation6], 32
    %v87 = vld [vmem:[%s86] sm:$0xff]
    %v88 = vstv %s56
    %v89 = vmul.f32 %v88, %v79
    %v90 = vstv %s58
    %v91 = vmul.f32 %v90, %v81
    %v92 = vadd.f32 %v89, %v91
    %v93 = vstv %s60
    %v94 = vmul.f32 %v93, %v83
    %v95 = vadd.f32 %v92, %v94
    %v96 = vstv %s62
    %v97 = vadd.f32 %v95, %v96
    %v98 = vstv %s64
    %v99 = vmul.f32 %v98, %v79
    %v100 = vstv %s66
    %v101 = vmul.f32 %v100, %v81
    %v102 = vadd.f32 %v99, %v101
    %v103 = vstv %s68
    %v104 = vmul.f32 %v103, %v83
    %v105 = vadd.f32 %v102, %v104
    %v106 = vstv %s70
    %v107 = vadd.f32 %v105, %v106
    %v108 = vstv %s72
    %v109 = vmul.f32 %v108, %v79
    %v110 = vstv %s74
    %v111 = vmul.f32 %v110, %v81
    %v112 = vadd.f32 %v109, %v111
    %v113 = vstv %s76
    %v114 = vmul.f32 %v113, %v83
    %v115 = vadd.f32 %v112, %v114
    %v116 = vstv %s78
    %v117 = vadd.f32 %v115, %v116
    %v118 = vand.u32 2147483647, %v117
    %vm119 = vcmp.gt.f32.partialorder %v118, 0.0001
    %v120 = vsel %vm119, %v117, 0.0001
    %v121 = vrcp.pop %v120
    %v122 = vmul.f32 %v97, %v121
    %v123 = vsub.f32 %v122, %v85
    %v124 = vmul.f32 %v107, %v121
    %v125 = vsub.f32 %v124, %v87
    %v126 = vmul.f32 %v123, %v123
    %v127 = vmul.f32 %v125, %v125
    %v128 = vadd.f32 %v126, %v127
    %v129 = vrsqrt.pop %v128
    %v130 = vmul.f32 %v128, %v129
    %vm131 = vcmp.eq.f32.partialorder %v128, inf
    %v132 = vsel %vm131, %v128, %v130
    %vm133 = vcmp.eq.f32.partialorder %v128, 0.0
    %v134 = vand.u32 %v128, 2147483648
    %v135 = vsel %vm133, %v134, %v132
    %v136 = vld [vmem:[#allocation7] sm:$0xff]
    %v137 = vmul.f32 %v135, %v136
    %v138 = vadd.f32 %v137, 0.0
    %s139 = sadd.s32 %s54, 1
    %s140 = smul.u32 %s139, 128
    %s141 = sld [smem:[#allocation2 + %s140]]
    %s142 = sadd.s32 %s140, 1
    %s143 = sld [smem:[#allocation2 + %s142]]
    %s144 = sadd.s32 %s140, 2
    %s145 = sld [smem:[#allocation2 + %s144]]
    %s146 = sadd.s32 %s140, 3
    %s147 = sld [smem:[#allocation2 + %s146]]
    %s148 = sadd.s32 %s140, 4
    %s149 = sld [smem:[#allocation2 + %s148]]
    %s150 = sadd.s32 %s140, 5
    %s151 = sld [smem:[#allocation2 + %s150]]
    %s152 = sadd.s32 %s140, 6
    %s153 = sld [smem:[#allocation2 + %s152]]
    %s154 = sadd.s32 %s140, 7
    %s155 = sld [smem:[#allocation2 + %s154]]
    %s156 = sadd.s32 %s140, 8
    %s157 = sld [smem:[#allocation2 + %s156]]
    %s158 = sadd.s32 %s140, 9
    %s159 = sld [smem:[#allocation2 + %s158]]
    %s160 = sadd.s32 %s140, 10
    %s161 = sld [smem:[#allocation2 + %s160]]
    %s162 = sadd.s32 %s140, 11
    %s163 = sld [smem:[#allocation2 + %s162]]
    %s164 = scalar_lea.vmem [#allocation6], 40
    %v165 = vld [vmem:[%s164] sm:$0xff]
    %s166 = scalar_lea.vmem [#allocation6], 48
    %v167 = vld [vmem:[%s166] sm:$0xff]
    %s168 = scalar_lea.vmem [#allocation6], 56
    %v169 = vld [vmem:[%s168] sm:$0xff]
    %s170 = scalar_lea.vmem [#allocation6], 64
    %v171 = vld [vmem:[%s170] sm:$0xff]
    %s172 = scalar_lea.vmem [#allocation6], 72
    %v173 = vld [vmem:[%s172] sm:$0xff]
    %v174 = vstv %s141
    %v175 = vmul.f32 %v174, %v165
    %v176 = vstv %s143
    %v177 = vmul.f32 %v176, %v167
    %v178 = vadd.f32 %v175, %v177
    %v179 = vstv %s145
    %v180 = vmul.f32 %v179, %v169
    %v181 = vadd.f32 %v178, %v180
    %v182 = vstv %s147
    %v183 = vadd.f32 %v181, %v182
    %v184 = vstv %s149
    %v185 = vmul.f32 %v184, %v165
    %v186 = vstv %s151
    %v187 = vmul.f32 %v186, %v167
    %v188 = vadd.f32 %v185, %v187
    %v189 = vstv %s153
    %v190 = vmul.f32 %v189, %v169
    %v191 = vadd.f32 %v188, %v190
    %v192 = vstv %s155
    %v193 = vadd.f32 %v191, %v192
    %v194 = vstv %s157
    %v195 = vmul.f32 %v194, %v165
    %v196 = vstv %s159
    %v197 = vmul.f32 %v196, %v167
    %v198 = vadd.f32 %v195, %v197
    %v199 = vstv %s161
    %v200 = vmul.f32 %v199, %v169
    %v201 = vadd.f32 %v198, %v200
    %v202 = vstv %s163
    %v203 = vadd.f32 %v201, %v202
    %v204 = vand.u32 2147483647, %v203
    %vm205 = vcmp.gt.f32.partialorder %v204, 0.0001
    %v206 = vsel %vm205, %v203, 0.0001
    %v207 = vrcp.pop %v206
    %v208 = vmul.f32 %v183, %v207
    %v209 = vsub.f32 %v208, %v171
    %v210 = vmul.f32 %v193, %v207
    %v211 = vsub.f32 %v210, %v173
    %v212 = vmul.f32 %v209, %v209
    %v213 = vmul.f32 %v211, %v211
    %v214 = vadd.f32 %v212, %v213
    %v215 = vrsqrt.pop %v214
    %v216 = vmul.f32 %v214, %v215
    %vm217 = vcmp.eq.f32.partialorder %v214, inf
    %v218 = vsel %vm217, %v214, %v216
    %vm219 = vcmp.eq.f32.partialorder %v214, 0.0
    %v220 = vand.u32 %v214, 2147483648
    %v221 = vsel %vm219, %v220, %v218
    %s222 = scalar_lea.vmem [#allocation7], 8
    %v223 = vld [vmem:[%s222] sm:$0xff]
    %v224 = vmul.f32 %v221, %v223
    %v225 = vadd.f32 %v138, %v224
    %226 = vst [vmem:[#allocation9] sm:$0xff] %v225
    // Predicated region
    $region26: #{tpu_custom_call.1} parent=1 // pred_check
      _
    $region27: #{tpu_custom_call.1} parent=1 // pred_check_branch
      %228 = sbr.rel (0) target = $region29
    $region28: #{tpu_custom_call.1} parent=1 // pred_region
      %s230 = ssub.s32 128, 128
      %231 = vsyncadd [#allocation4], %s230
      %s233 = sshll.u32 [#allocation9], 4
      %s234 = int_to_ptr.vmem [resolvable:$true] %s233
      %236 = dma.vmem_to_hbm [thread:$0]  %s234, 128, %s3, [#allocation4]
    $region29: #{tpu_custom_call.1} parent=1 // pred_fallthru
      _
    // Predicated region
    $region30: #{tpu_custom_call.1} parent=1 // pred_check
      _
    $region31: #{tpu_custom_call.1} parent=1 // pred_check_branch
      %238 = sbr.rel (0) target = $region33
    $region32: #{tpu_custom_call.1} parent=1 // pred_region
      %239 = dma.done [#allocation4], 128
    $region33: #{tpu_custom_call.1} parent=1 // pred_fallthru
      _
    %240 = vsyncpa [#allocation3], 1
    %241 = vsyncpa [#allocation8], 1
    %242 = vsyncpa [#allocation4], 1
    %243 = vsyncpa [#allocation5], 1

</llo_original>
